<compile_context>
chip_gen: v5e
topology: v5e:2x2
jax: 0.10.0
libtpu: 0.0.40
codegen_flags: <defaults>
</compile_context>

<pallas_src>
import functools

import jax
import jax.numpy as jnp
from jax.experimental import pallas as pl
from jax.experimental.pallas import tpu as pltpu

# Hash constants (all fit in positive int32, odd multipliers).
_C_ROW = 0x27D4EB2F
_C_COL = 0x165667B1
_C_SEED = 0x61C88647
_C_M1 = 0x7FEB352D
_C_M2 = 0x3243F6A9


def _round_up(v, m):
    return (v + m - 1) // m * m


def _pad2d(a, rows, cols):
    pr, pc = rows - a.shape[0], cols - a.shape[1]
    if pr or pc:
        a = jnp.pad(a, ((0, pr), (0, pc)))
    return a


def _hash_bits23(shape, seed, row0, salt):
    """Stateless per-element pseudo-random bits in [0, 2^23). jnp-only (VPU int ops)."""
    r = jax.lax.broadcasted_iota(jnp.int32, shape, 0) + row0
    c = jax.lax.broadcasted_iota(jnp.int32, shape, 1)
    h = (r * jnp.int32(_C_ROW)
         + c * jnp.int32(_C_COL)
         + (seed + jnp.int32(salt)) * jnp.int32(_C_SEED))
    # murmur-style mixing; (h >> k) & mask emulates a logical right shift on int32.
    h = h ^ ((h >> 16) & jnp.int32(0xFFFF))
    h = h * jnp.int32(_C_M1)
    h = h ^ ((h >> 15) & jnp.int32(0x1FFFF))
    h = h * jnp.int32(_C_M2)
    h = h ^ ((h >> 16) & jnp.int32(0xFFFF))
    return h & jnp.int32((1 << 23) - 1)


def _dropout(h, p, seed, row0, salt):
    """nn.Dropout (training): zero with prob p, scale survivors by 1/(1-p)."""
    u = _hash_bits23(h.shape, seed, row0, salt)
    thresh = jnp.int32(int(p * float(1 << 23)))
    keep = u >= thresh
    return jnp.where(keep, h * jnp.float32(1.0 / (1.0 - p)), 0.0)


def _prenet_kernel(seed_ref, x_ref, w1_ref, b1_ref, w2_ref, b2_ref, o_ref,
                   *, p, training, tile_n):
    seed = seed_ref[0]
    row0 = pl.program_id(0) * tile_n            # global row offset of this tile

    # Linear 1 (bf16 inputs, f32 accumulation) + bias + ReLU, all in f32.
    h = jnp.dot(x_ref[...], w1_ref[...], preferred_element_type=jnp.float32)
    h = jnp.maximum(h + b1_ref[...], 0.0)
    if training and p > 0.0:
        h = _dropout(h, p, seed, row0, salt=0x01234567)

    # Linear 2 + bias + ReLU.
    y = jnp.dot(h.astype(jnp.bfloat16), w2_ref[...],
                preferred_element_type=jnp.float32)
    y = jnp.maximum(y + b2_ref[...], 0.0)
    if training and p > 0.0:
        y = _dropout(y, p, seed, row0, salt=0x07654321)

    o_ref[...] = y.astype(o_ref.dtype)


def prenet_forward(x, w1, b1, w2, b2, *, seed=0, p=0.5, training=True, tile_n=512):
    """x: [..., input_size]. Weights stored as [in, out] (x @ W + b). Returns [..., output_size]."""
    assert 0.0 <= p < 1.0, "dropout prob must be in [0, 1)"
    in_size = x.shape[-1]
    hid_size = w1.shape[1]
    out_size = w2.shape[1]
    lead = x.shape[:-1]

    x2d = x.reshape(-1, in_size).astype(jnp.float32)
    n = x2d.shape[0]

    # Lane-dense feature dims (multiples of 128); rows tiled over the grid.
    in_p = _round_up(in_size, 128)
    hid_p = _round_up(hid_size, 128)
    out_p = _round_up(out_size, 128)

    tn = min(tile_n, _round_up(n, 16))
    tn = _round_up(tn, 16)
    n_pad = _round_up(n, tn)
    grid = (n_pad // tn,)

    x_p = _pad2d(x2d, n_pad, in_p).astype(jnp.bfloat16)
    w1_p = _pad2d(w1.astype(jnp.float32), in_p, hid_p).astype(jnp.bfloat16)
    w2_p = _pad2d(w2.astype(jnp.float32), hid_p, out_p).astype(jnp.bfloat16)
    b1_p = _pad2d(b1.reshape(1, hid_size).astype(jnp.float32), 1, hid_p)
    b2_p = _pad2d(b2.reshape(1, out_size).astype(jnp.float32), 1, out_p)
    seed_arr = jnp.asarray([seed], dtype=jnp.int32)

    kernel = functools.partial(_prenet_kernel, p=float(p),
                               training=bool(training), tile_n=tn)

    out = pl.pallas_call(
        kernel,
        out_shape=jax.ShapeDtypeStruct((n_pad, out_p), jnp.float32),
        grid_spec=pltpu.PrefetchScalarGridSpec(
            num_scalar_prefetch=1,                      # seed lands in SMEM
            grid=grid,
            in_specs=[
                pl.BlockSpec((tn, in_p), lambda i, s: (i, 0)),       # x tile
                pl.BlockSpec((in_p, hid_p), lambda i, s: (0, 0)),    # W1 (resident)
                pl.BlockSpec((1, hid_p), lambda i, s: (0, 0)),       # b1
                pl.BlockSpec((hid_p, out_p), lambda i, s: (0, 0)),   # W2 (resident)
                pl.BlockSpec((1, out_p), lambda i, s: (0, 0)),       # b2
            ],
            out_specs=pl.BlockSpec((tn, out_p), lambda i, s: (i, 0)),
        ),
        compiler_params=pltpu.CompilerParams(
            dimension_semantics=("parallel",)),
    )(seed_arr, x_p, w1_p, b1_p, w2_p, b2_p)

    return out[:n, :out_size].reshape(*lead, out_size)


def init_prenet_params(key, input_size, hidden_size, output_size):
    """Deterministic parameter init (Kaiming-uniform-ish bounds like nn.Linear)."""
    k1, k2, k3, k4 = jax.random.split(key, 4)
    lim1 = 1.0 / (input_size ** 0.5)
    lim2 = 1.0 / (hidden_size ** 0.5)
    # Stored as [in, out] (transposed relative to PyTorch's [out, in]) for x @ W.
    w1 = jax.random.uniform(k1, (input_size, hidden_size), jnp.float32, -lim1, lim1)
    b1 = jax.random.uniform(k2, (hidden_size,), jnp.float32, -lim1, lim1)
    w2 = jax.random.uniform(k3, (hidden_size, output_size), jnp.float32, -lim2, lim2)
    b2 = jax.random.uniform(k4, (output_size,), jnp.float32, -lim2, lim2)
    return w1, b1, w2, b2


if __name__ == "__main__":
    # PreNet usage: x [batch, seq, input_size].
    batch, seq = 2, 8
    input_size, hidden_size, output_size = 32, 64, 32

    key = jax.random.PRNGKey(0)
    kx, kp = jax.random.split(key)
    x = jax.random.normal(kx, (batch, seq, input_size), dtype=jnp.float32)
    w1, b1, w2, b2 = init_prenet_params(kp, input_size, hidden_size, output_size)

    # Training mode (dropout active, default for a freshly constructed nn.Module).
    y = prenet_forward(x, w1, b1, w2, b2, seed=0, p=0.5, training=True)
    jax.block_until_ready(y)
    assert y.shape == (batch, seq, output_size)
    assert bool(jnp.all(jnp.isfinite(y)))

    # Eval-mode (no dropout) path matches a pure-JAX f32 reference up to bf16 matmul precision.
    y_eval = prenet_forward(x, w1, b1, w2, b2, training=False)
    ref = jnp.maximum(jnp.maximum(x @ w1 + b1, 0.0) @ w2 + b2, 0.0)
    jax.block_until_ready(y_eval)
    assert jnp.allclose(y_eval, ref, atol=5e-2, rtol=5e-2)

    print("KERNEL_OK")
</pallas_src>

<mosaic_0001>
module attributes {stable_mosaic.version = 11 : i64} {
  func.func @_prenet_kernel(%arg0: i32, %arg1: memref<1xi32, #tpu.memory_space<smem>>, %arg2: memref<16x128xbf16, #tpu.memory_space<vmem>>, %arg3: memref<128x128xbf16, #tpu.memory_space<vmem>>, %arg4: memref<1x128xf32, #tpu.memory_space<vmem>>, %arg5: memref<128x128xbf16, #tpu.memory_space<vmem>>, %arg6: memref<1x128xf32, #tpu.memory_space<vmem>>, %arg7: memref<16x128xf32, #tpu.memory_space<vmem>>) attributes {dimension_semantics = [#tpu.dimension_semantics<parallel>], iteration_bounds = array<i64: 1>, scalar_prefetch = 1 : i64, scratch_operands = 0 : i64, tpu.core_type = #tpu.core_type<tc>, window_params = [{transform_indices = @transform_0, window_bounds = array<i64: 16, 128>}, {pipeline_mode = #tpu.pipeline_mode<synchronous>, transform_indices = @transform_1, window_bounds = array<i64: 128, 128>}, {pipeline_mode = #tpu.pipeline_mode<synchronous>, transform_indices = @transform_2, window_bounds = array<i64: 1, 128>}, {pipeline_mode = #tpu.pipeline_mode<synchronous>, transform_indices = @transform_3, window_bounds = array<i64: 128, 128>}, {pipeline_mode = #tpu.pipeline_mode<synchronous>, transform_indices = @transform_4, window_bounds = array<i64: 1, 128>}, {transform_indices = @transform_5, window_bounds = array<i64: 16, 128>}]} {
    %c0 = arith.constant 0 : index
    %0 = memref.load %arg1[%c0] : memref<1xi32, #tpu.memory_space<smem>>
    %c16_i32 = arith.constant 16 : i32
    %1 = arith.muli %arg0, %c16_i32 : i32
    %c0_0 = arith.constant 0 : index
    %c0_1 = arith.constant 0 : index
    %2 = vector.load %arg2[%c0_0, %c0_1] : memref<16x128xbf16, #tpu.memory_space<vmem>>, vector<16x128xbf16>
    %c0_2 = arith.constant 0 : index
    %c0_3 = arith.constant 0 : index
    %3 = vector.load %arg3[%c0_2, %c0_3] : memref<128x128xbf16, #tpu.memory_space<vmem>>, vector<128x128xbf16>
    %cst = arith.constant dense<0.000000e+00> : vector<16x128xf32>
    %4 = tpu.matmul %2, %3, %cst {dimension_numbers = #tpu.dot_dimension_numbers<[1], [0], [0], [1], [0, 0, 1, 1], [], []>} : vector<16x128xbf16>, vector<128x128xbf16>, vector<16x128xf32> -> vector<16x128xf32>
    %c0_4 = arith.constant 0 : index
    %c0_5 = arith.constant 0 : index
    %5 = vector.load %arg4[%c0_4, %c0_5] : memref<1x128xf32, #tpu.memory_space<vmem>>, vector<1x128xf32>
    %6 = vector.broadcast %5 : vector<1x128xf32> to vector<16x128xf32>
    %7 = arith.addf %4, %6 : vector<16x128xf32>
    %cst_6 = arith.constant 0.000000e+00 : f32
    %8 = vector.broadcast %cst_6 : f32 to vector<16x128xf32>
    %9 = arith.maximumf %7, %8 : vector<16x128xf32>
    %10 = tpu.iota {dimensions = array<i32: 0>} : vector<16x128xi32>
    %11 = vector.broadcast %1 : i32 to vector<16x128xi32>
    %12 = arith.addi %10, %11 : vector<16x128xi32>
    %13 = tpu.iota {dimensions = array<i32: 1>} : vector<16x128xi32>
    %c668265263_i32 = arith.constant 668265263 : i32
    %14 = vector.broadcast %c668265263_i32 : i32 to vector<16x128xi32>
    %15 = arith.muli %12, %14 : vector<16x128xi32>
    %c374761393_i32 = arith.constant 374761393 : i32
    %16 = vector.broadcast %c374761393_i32 : i32 to vector<16x128xi32>
    %17 = arith.muli %13, %16 : vector<16x128xi32>
    %18 = arith.addi %15, %17 : vector<16x128xi32>
    %c19088743_i32 = arith.constant 19088743 : i32
    %19 = arith.addi %0, %c19088743_i32 : i32
    %c1640531527_i32 = arith.constant 1640531527 : i32
    %20 = arith.muli %19, %c1640531527_i32 : i32
    %21 = vector.broadcast %20 : i32 to vector<16x128xi32>
    %22 = arith.addi %18, %21 : vector<16x128xi32>
    %c16_i32_7 = arith.constant 16 : i32
    %23 = vector.broadcast %c16_i32_7 : i32 to vector<16x128xi32>
    %24 = arith.shrsi %22, %23 : vector<16x128xi32>
    %c65535_i32 = arith.constant 65535 : i32
    %25 = vector.broadcast %c65535_i32 : i32 to vector<16x128xi32>
    %26 = arith.andi %24, %25 : vector<16x128xi32>
    %27 = arith.xori %22, %26 : vector<16x128xi32>
    %c2146121005_i32 = arith.constant 2146121005 : i32
    %28 = vector.broadcast %c2146121005_i32 : i32 to vector<16x128xi32>
    %29 = arith.muli %27, %28 : vector<16x128xi32>
    %c15_i32 = arith.constant 15 : i32
    %30 = vector.broadcast %c15_i32 : i32 to vector<16x128xi32>
    %31 = arith.shrsi %29, %30 : vector<16x128xi32>
    %c131071_i32 = arith.constant 131071 : i32
    %32 = vector.broadcast %c131071_i32 : i32 to vector<16x128xi32>
    %33 = arith.andi %31, %32 : vector<16x128xi32>
    %34 = arith.xori %29, %33 : vector<16x128xi32>
    %c843314857_i32 = arith.constant 843314857 : i32
    %35 = vector.broadcast %c843314857_i32 : i32 to vector<16x128xi32>
    %36 = arith.muli %34, %35 : vector<16x128xi32>
    %c16_i32_8 = arith.constant 16 : i32
    %37 = vector.broadcast %c16_i32_8 : i32 to vector<16x128xi32>
    %38 = arith.shrsi %36, %37 : vector<16x128xi32>
    %c65535_i32_9 = arith.constant 65535 : i32
    %39 = vector.broadcast %c65535_i32_9 : i32 to vector<16x128xi32>
    %40 = arith.andi %38, %39 : vector<16x128xi32>
    %41 = arith.xori %36, %40 : vector<16x128xi32>
    %c8388607_i32 = arith.constant 8388607 : i32
    %42 = vector.broadcast %c8388607_i32 : i32 to vector<16x128xi32>
    %43 = arith.andi %41, %42 : vector<16x128xi32>
    %c4194304_i32 = arith.constant 4194304 : i32
    %44 = vector.broadcast %c4194304_i32 : i32 to vector<16x128xi32>
    %45 = arith.cmpi sge, %43, %44 : vector<16x128xi32>
    %cst_10 = arith.constant 2.000000e+00 : f32
    %46 = vector.broadcast %cst_10 : f32 to vector<16x128xf32>
    %47 = arith.mulf %9, %46 : vector<16x128xf32>
    %cst_11 = arith.constant 0.000000e+00 : f32
    %48 = vector.broadcast %cst_11 : f32 to vector<16x128xf32>
    %49 = arith.select %45, %47, %48 : vector<16x128xi1>, vector<16x128xf32>
    %50 = arith.truncf %49 : vector<16x128xf32> to vector<16x128xbf16>
    %c0_12 = arith.constant 0 : index
    %c0_13 = arith.constant 0 : index
    %51 = vector.load %arg5[%c0_12, %c0_13] : memref<128x128xbf16, #tpu.memory_space<vmem>>, vector<128x128xbf16>
    %cst_14 = arith.constant dense<0.000000e+00> : vector<16x128xf32>
    %52 = tpu.matmul %50, %51, %cst_14 {dimension_numbers = #tpu.dot_dimension_numbers<[1], [0], [0], [1], [0, 0, 1, 1], [], []>} : vector<16x128xbf16>, vector<128x128xbf16>, vector<16x128xf32> -> vector<16x128xf32>
    %c0_15 = arith.constant 0 : index
    %c0_16 = arith.constant 0 : index
    %53 = vector.load %arg6[%c0_15, %c0_16] : memref<1x128xf32, #tpu.memory_space<vmem>>, vector<1x128xf32>
    %54 = vector.broadcast %53 : vector<1x128xf32> to vector<16x128xf32>
    %55 = arith.addf %52, %54 : vector<16x128xf32>
    %cst_17 = arith.constant 0.000000e+00 : f32
    %56 = vector.broadcast %cst_17 : f32 to vector<16x128xf32>
    %57 = arith.maximumf %55, %56 : vector<16x128xf32>
    %58 = tpu.iota {dimensions = array<i32: 0>} : vector<16x128xi32>
    %59 = vector.broadcast %1 : i32 to vector<16x128xi32>
    %60 = arith.addi %58, %59 : vector<16x128xi32>
    %61 = tpu.iota {dimensions = array<i32: 1>} : vector<16x128xi32>
    %c668265263_i32_18 = arith.constant 668265263 : i32
    %62 = vector.broadcast %c668265263_i32_18 : i32 to vector<16x128xi32>
    %63 = arith.muli %60, %62 : vector<16x128xi32>
    %c374761393_i32_19 = arith.constant 374761393 : i32
    %64 = vector.broadcast %c374761393_i32_19 : i32 to vector<16x128xi32>
    %65 = arith.muli %61, %64 : vector<16x128xi32>
    %66 = arith.addi %63, %65 : vector<16x128xi32>
    %c124076833_i32 = arith.constant 124076833 : i32
    %67 = arith.addi %0, %c124076833_i32 : i32
    %c1640531527_i32_20 = arith.constant 1640531527 : i32
    %68 = arith.muli %67, %c1640531527_i32_20 : i32
    %69 = vector.broadcast %68 : i32 to vector<16x128xi32>
    %70 = arith.addi %66, %69 : vector<16x128xi32>
    %c16_i32_21 = arith.constant 16 : i32
    %71 = vector.broadcast %c16_i32_21 : i32 to vector<16x128xi32>
    %72 = arith.shrsi %70, %71 : vector<16x128xi32>
    %c65535_i32_22 = arith.constant 65535 : i32
    %73 = vector.broadcast %c65535_i32_22 : i32 to vector<16x128xi32>
    %74 = arith.andi %72, %73 : vector<16x128xi32>
    %75 = arith.xori %70, %74 : vector<16x128xi32>
    %c2146121005_i32_23 = arith.constant 2146121005 : i32
    %76 = vector.broadcast %c2146121005_i32_23 : i32 to vector<16x128xi32>
    %77 = arith.muli %75, %76 : vector<16x128xi32>
    %c15_i32_24 = arith.constant 15 : i32
    %78 = vector.broadcast %c15_i32_24 : i32 to vector<16x128xi32>
    %79 = arith.shrsi %77, %78 : vector<16x128xi32>
    %c131071_i32_25 = arith.constant 131071 : i32
    %80 = vector.broadcast %c131071_i32_25 : i32 to vector<16x128xi32>
    %81 = arith.andi %79, %80 : vector<16x128xi32>
    %82 = arith.xori %77, %81 : vector<16x128xi32>
    %c843314857_i32_26 = arith.constant 843314857 : i32
    %83 = vector.broadcast %c843314857_i32_26 : i32 to vector<16x128xi32>
    %84 = arith.muli %82, %83 : vector<16x128xi32>
    %c16_i32_27 = arith.constant 16 : i32
    %85 = vector.broadcast %c16_i32_27 : i32 to vector<16x128xi32>
    %86 = arith.shrsi %84, %85 : vector<16x128xi32>
    %c65535_i32_28 = arith.constant 65535 : i32
    %87 = vector.broadcast %c65535_i32_28 : i32 to vector<16x128xi32>
    %88 = arith.andi %86, %87 : vector<16x128xi32>
    %89 = arith.xori %84, %88 : vector<16x128xi32>
    %c8388607_i32_29 = arith.constant 8388607 : i32
    %90 = vector.broadcast %c8388607_i32_29 : i32 to vector<16x128xi32>
    %91 = arith.andi %89, %90 : vector<16x128xi32>
    %c4194304_i32_30 = arith.constant 4194304 : i32
    %92 = vector.broadcast %c4194304_i32_30 : i32 to vector<16x128xi32>
    %93 = arith.cmpi sge, %91, %92 : vector<16x128xi32>
    %cst_31 = arith.constant 2.000000e+00 : f32
    %94 = vector.broadcast %cst_31 : f32 to vector<16x128xf32>
    %95 = arith.mulf %57, %94 : vector<16x128xf32>
    %cst_32 = arith.constant 0.000000e+00 : f32
    %96 = vector.broadcast %cst_32 : f32 to vector<16x128xf32>
    %97 = arith.select %93, %95, %96 : vector<16x128xi1>, vector<16x128xf32>
    %c0_33 = arith.constant 0 : index
    %c0_34 = arith.constant 0 : index
    %98 = vector.load %arg7[%c0_33, %c0_34] : memref<16x128xf32, #tpu.memory_space<vmem>>, vector<16x128xf32>
    tpu.vector_store %arg7[%c0_33, %c0_34], %97 {strides = array<i32>} : memref<16x128xf32, #tpu.memory_space<vmem>>, vector<16x128xf32>,
    return
  }
  func.func @transform_0(%arg0: i32, %arg1: memref<1xi32, #tpu.memory_space<smem>>) -> (i32, i32) {
    %c0_i32 = arith.constant 0 : i32
    %c0_i32_0 = arith.constant 0 : i32
    return %arg0, %c0_i32 : i32, i32
  }
  func.func @transform_1(%arg0: i32, %arg1: memref<1xi32, #tpu.memory_space<smem>>) -> (i32, i32) {
    %c0_i32 = arith.constant 0 : i32
    %c0_i32_0 = arith.constant 0 : i32
    %c0_i32_1 = arith.constant 0 : i32
    return %c0_i32, %c0_i32_0 : i32, i32
  }
  func.func @transform_2(%arg0: i32, %arg1: memref<1xi32, #tpu.memory_space<smem>>) -> (i32, i32) {
    %c0_i32 = arith.constant 0 : i32
    %c0_i32_0 = arith.constant 0 : i32
    %c0_i32_1 = arith.constant 0 : i32
    return %c0_i32, %c0_i32_0 : i32, i32
  }
  func.func @transform_3(%arg0: i32, %arg1: memref<1xi32, #tpu.memory_space<smem>>) -> (i32, i32) {
    %c0_i32 = arith.constant 0 : i32
    %c0_i32_0 = arith.constant 0 : i32
    %c0_i32_1 = arith.constant 0 : i32
    return %c0_i32, %c0_i32_0 : i32, i32
  }
  func.func @transform_4(%arg0: i32, %arg1: memref<1xi32, #tpu.memory_space<smem>>) -> (i32, i32) {
    %c0_i32 = arith.constant 0 : i32
    %c0_i32_0 = arith.constant 0 : i32
    %c0_i32_1 = arith.constant 0 : i32
    return %c0_i32, %c0_i32_0 : i32, i32
  }
  func.func @transform_5(%arg0: i32, %arg1: memref<1xi32, #tpu.memory_space<smem>>) -> (i32, i32) {
    %c0_i32 = arith.constant 0 : i32
    %c0_i32_0 = arith.constant 0 : i32
    return %arg0, %c0_i32 : i32, i32
  }
}

</mosaic_0001>

<llo_original>
// kernel: tpu_custom_call.1
$region0: #{tpu_custom_call.1}
  #allocation0 [shape = 'u32[]', space=smem, size = 0x4, offset = 0x4, fixed_abs, tag = 'smem constant byte address 0x4 - core index']
  #allocation1 [shape = 'u32[72,128]{1,0:T(1,128)}', space=vmem, size = 0x9000, scoped, tag = 'internal scratch']
  #allocation2 [shape = 's32[1]{0}', space=sflag, size = 0x4, scoped, tag = 'scoped memory for tpu_custom_call.1']
  #allocation3 [shape = 's32[1]{0:T(128)S(6)}', space=smem, size = 0x200, scoped, tag = 'prefetched SMEM operand 0']
  %s0 = inlined_call_operand.<no memory space> [shape: s32[1], index: 0, kind: input, shape index: {}]
  %s1 = inlined_call_operand.hbm [shape: bf16[16,128], index: 1, kind: input, shape index: {}]
  %s2 = inlined_call_operand.hbm [shape: bf16[128,128], index: 2, kind: input, shape index: {}]
  %s3 = inlined_call_operand.vmem [shape: f32[1,128], index: 3, kind: input, shape index: {}]
  %s4 = inlined_call_operand.hbm [shape: bf16[128,128], index: 4, kind: input, shape index: {}]
  %s5 = inlined_call_operand.vmem [shape: f32[1,128], index: 5, kind: input, shape index: {}]
  %s6 = inlined_call_operand.hbm [shape: f32[16,128], index: 6, kind: output, shape index: {}]
  %s7 = sld [smem:[#allocation0]]
  $region42: #{tpu_custom_call.1} parent=0
    _
  %s9 = ssub.s32 1, %s7
  %s10 = scalar_select 0, %s9, %s7
  %11 = sst [smem:[#allocation3]] %s0
  $region1: #{tpu_custom_call.1} parent=0
    #allocation4 [shape = 'u8[4096]{0}', space=vmem, size = 0x1000, scoped, tag = 'input window, operand 1, single buffered']
    #allocation5 [shape = 's32[1]{0}', space=sflag, size = 0x4, scoped, tag = 'scoped memory for tpu_custom_call.1']
    #allocation6 [shape = 's32[1]{0}', space=sflag, size = 0x4, scoped, tag = 'scoped memory for tpu_custom_call.1']
    #allocation7 [shape = 'u8[32768]{0}', space=vmem, size = 0x8000, scoped, tag = 'input window, operand 2, single buffered']
    #allocation8 [shape = 's32[1]{0}', space=sflag, size = 0x4, scoped, tag = 'scoped memory for tpu_custom_call.1']
    #allocation9 [shape = 'u8[32768]{0}', space=vmem, size = 0x8000, scoped, tag = 'input window, operand 4, single buffered']
    #allocation10 [shape = 'u8[8192]{0}', space=vmem, size = 0x2000, scoped, tag = 'output window, operand 0, single buffered']
    %12 = vsyncpa [#allocation5], 0
    %13 = vsyncpa [#allocation8], 0
    %14 = vsyncpa [#allocation6], 0
    // Predicated region
    $region2: #{tpu_custom_call.1} parent=1 // pred_check
      _
    $region3: #{tpu_custom_call.1} parent=1 // pred_check_branch
      %16 = sbr.rel (0) target = $region5
    $region4: #{tpu_custom_call.1} parent=1 // pred_region
      %18 = vsyncadd [#allocation5], 0
      %s19 = sshll.u32 %s1, 4
      %s20 = int_to_ptr.hbm [resolvable:$true] %s19
      %s21 = sshll.u32 [#allocation4], 4
      %s22 = int_to_ptr.vmem [resolvable:$true] %s21
      %27 = dma.hbm_to_vmem [thread:$0]  %s20, 128, %s22, [#allocation5], 64, 64, 4
    $region5: #{tpu_custom_call.1} parent=1 // pred_fallthru
      _
    // Predicated region
    $region6: #{tpu_custom_call.1} parent=1 // pred_check
      _
    $region7: #{tpu_custom_call.1} parent=1 // pred_check_branch
      %29 = sbr.rel (0) target = $region9
    $region8: #{tpu_custom_call.1} parent=1 // pred_region
      %31 = vsyncadd [#allocation8], 0
      %s32 = sshll.u32 %s2, 4
      %s33 = int_to_ptr.hbm [resolvable:$true] %s32
      %s34 = sshll.u32 [#allocation7], 4
      %s35 = int_to_ptr.vmem [resolvable:$true] %s34
      %40 = dma.hbm_to_vmem [thread:$0]  %s33, 1024, %s35, [#allocation8], 64, 64, 4
    $region9: #{tpu_custom_call.1} parent=1 // pred_fallthru
      _
    // Predicated region
    $region10: #{tpu_custom_call.1} parent=1 // pred_check
      _
    $region11: #{tpu_custom_call.1} parent=1 // pred_check_branch
      %42 = sbr.rel (0) target = $region13
    $region12: #{tpu_custom_call.1} parent=1 // pred_region
      _
    $region13: #{tpu_custom_call.1} parent=1 // pred_fallthru
      _
    // Predicated region
    $region14: #{tpu_custom_call.1} parent=1 // pred_check
      _
    $region15: #{tpu_custom_call.1} parent=1 // pred_check_branch
      %44 = sbr.rel (0) target = $region17
    $region16: #{tpu_custom_call.1} parent=1 // pred_region
      %46 = vsyncadd [#allocation8], 0
      %s47 = sshll.u32 %s4, 4
      %s48 = int_to_ptr.hbm [resolvable:$true] %s47
      %s49 = sshll.u32 [#allocation9], 4
      %s50 = int_to_ptr.vmem [resolvable:$true] %s49
      %55 = dma.hbm_to_vmem [thread:$0]  %s48, 1024, %s50, [#allocation8], 64, 64, 4
    $region17: #{tpu_custom_call.1} parent=1 // pred_fallthru
      _
    // Predicated region
    $region18: #{tpu_custom_call.1} parent=1 // pred_check
      _
    $region19: #{tpu_custom_call.1} parent=1 // pred_check_branch
      %57 = sbr.rel (0) target = $region21
    $region20: #{tpu_custom_call.1} parent=1 // pred_region
      _
    $region21: #{tpu_custom_call.1} parent=1 // pred_fallthru
      _
    // Predicated region
    $region22: #{tpu_custom_call.1} parent=1 // pred_check
      _
    $region23: #{tpu_custom_call.1} parent=1 // pred_check_branch
      %59 = sbr.rel (0) target = $region25
    $region24: #{tpu_custom_call.1} parent=1 // pred_region
      %61 = dma.done [#allocation5], 128
    $region25: #{tpu_custom_call.1} parent=1 // pred_fallthru
      _
    // Predicated region
    $region26: #{tpu_custom_call.1} parent=1 // pred_check
      _
    $region27: #{tpu_custom_call.1} parent=1 // pred_check_branch
      %63 = sbr.rel (0) target = $region29
    $region28: #{tpu_custom_call.1} parent=1 // pred_region
      %65 = dma.done [#allocation8], 1024
    $region29: #{tpu_custom_call.1} parent=1 // pred_fallthru
      _
    // Predicated region
    $region30: #{tpu_custom_call.1} parent=1 // pred_check
      _
    $region31: #{tpu_custom_call.1} parent=1 // pred_check_branch
      %67 = sbr.rel (0) target = $region33
    $region32: #{tpu_custom_call.1} parent=1 // pred_region
      %69 = dma.done [#allocation8], 1024
    $region33: #{tpu_custom_call.1} parent=1 // pred_fallthru
      _
    %s70 = sld [smem:[#allocation3]]
    %s71 = smul.u32 0, 16
    %v72 = vld [vmem:[#allocation4] sm:$0xf]
    %v73 = vld [vmem:[#allocation4 + $0x4] sm:$0xf]
    %v74 = vld [vmem:[#allocation7] sm:$0xf]
    %v75 = vld [vmem:[#allocation7 + $0x4] sm:$0xf]
    %v76 = vld [vmem:[#allocation7 + $0x8] sm:$0xf]
    %v77 = vld [vmem:[#allocation7 + $0xc] sm:$0xf]
    %v78 = vld [vmem:[#allocation7 + $0x10] sm:$0xf]
    %v79 = vld [vmem:[#allocation7 + $0x14] sm:$0xf]
    %v80 = vld [vmem:[#allocation7 + $0x18] sm:$0xf]
    %v81 = vld [vmem:[#allocation7 + $0x1c] sm:$0xf]
    %v82 = vld [vmem:[#allocation7 + $0x20] sm:$0xf]
    %v83 = vld [vmem:[#allocation7 + $0x24] sm:$0xf]
    %v84 = vld [vmem:[#allocation7 + $0x28] sm:$0xf]
    %v85 = vld [vmem:[#allocation7 + $0x2c] sm:$0xf]
    %v86 = vld [vmem:[#allocation7 + $0x30] sm:$0xf]
    %v87 = vld [vmem:[#allocation7 + $0x34] sm:$0xf]
    %v88 = vld [vmem:[#allocation7 + $0x38] sm:$0xf]
    %v89 = vld [vmem:[#allocation7 + $0x3c] sm:$0xf]
    %v90 = vld [vmem:[%s3] sm:$0x1]
    %v92 = vperm.slane %v90, 0
    %v96 = vunpack.c.l.b16 %v72
    %v97 = vunpack.c.l.b16 %v73
    %v98 = vpack.c.b16 %v97, %v96
    %v116 = vunpack.c.l.b16 %v74
    %v117 = vunpack.c.l.b16 %v75
    %v118 = vunpack.c.l.b16 %v76
    %v119 = vunpack.c.l.b16 %v77
    %v120 = vunpack.c.l.b16 %v78
    %v121 = vunpack.c.l.b16 %v79
    %v122 = vunpack.c.l.b16 %v80
    %v123 = vunpack.c.l.b16 %v81
    %v124 = vunpack.c.l.b16 %v82
    %v125 = vunpack.c.l.b16 %v83
    %v126 = vunpack.c.l.b16 %v84
    %v127 = vunpack.c.l.b16 %v85
    %v128 = vunpack.c.l.b16 %v86
    %v129 = vunpack.c.l.b16 %v87
    %v130 = vunpack.c.l.b16 %v88
    %v131 = vunpack.c.l.b16 %v89
    %v132 = vpack.c.b16 %v117, %v116
    %v133 = vpack.c.b16 %v119, %v118
    %v134 = vpack.c.b16 %v121, %v120
    %v135 = vpack.c.b16 %v123, %v122
    %v136 = vpack.c.b16 %v125, %v124
    %v137 = vpack.c.b16 %v127, %v126
    %v138 = vpack.c.b16 %v129, %v128
    %v139 = vpack.c.b16 %v131, %v130
    %148 = vmatpush.bf16.msra.mxu0 %v139
    %149 = vmatpush.bf16.msra.mxu0 %v138
    %150 = vmatpush.bf16.msra.mxu0 %v137
    %151 = vmatpush.bf16.msra.mxu0 %v136
    %152 = vmatpush.bf16.msra.mxu0 %v135
    %153 = vmatpush.bf16.msra.mxu0 %v134
    %154 = vmatpush.bf16.msra.mxu0 %v133
    %155 = vmatpush.bf16.msra.mxu0 %v132
    %156 = vmatmul.bf16.gmra.mxu0 %v98
    %v157 = vpop.f32.mrf.mxu0
    %v158 = vadd.f32 %v92, %v157
    %v159 = vpop.f32.mrf.mxu0
    %v160 = vadd.f32 %v92, %v159
    %161 = vdwg.mxu0
    %v162 = vmax.f32 %v158, 0.0
    %v163 = vmax.f32 %v160, 0.0
    %v164 = vlaneseq
    %v165 = vshrl.u32 %v164, 7
    %v166 = vadd.s32 %v165, 8
    %v167 = vstv %s71
    %v168 = vadd.s32 %v165, %v167
    %v169 = vadd.s32 %v166, %v167
    %v170 = vlaneseq
    %v171 = vand.u32 %v170, 127
    %v172 = vmul.u32 %v168, 668265263
    %v173 = vmul.u32 %v169, 668265263
    %v174 = vmul.u32 %v171, 374761393
    %v175 = vadd.s32 %v172, %v174
    %v176 = vadd.s32 %v173, %v174
    %s177 = sadd.s32 %s70, 19088743
    %s178 = smul.u32 %s177, 1640531527
    %v179 = vstv %s178
    %v180 = vadd.s32 %v175, %v179
    %v181 = vadd.s32 %v176, %v179
    %v182 = vshra.s32 %v180, 16
    %v183 = vshra.s32 %v181, 16
    %v184 = vand.u32 %v182, 65535
    %v185 = vand.u32 %v183, 65535
    %v186 = vxor.u32 %v180, %v184
    %v187 = vxor.u32 %v181, %v185
    %v188 = vmul.u32 %v186, 2146121005
    %v189 = vmul.u32 %v187, 2146121005
    %v190 = vshra.s32 %v188, 15
    %v191 = vshra.s32 %v189, 15
    %v192 = vand.u32 %v190, 131071
    %v193 = vand.u32 %v191, 131071
    %v194 = vxor.u32 %v188, %v192
    %v195 = vxor.u32 %v189, %v193
    %v196 = vmul.u32 %v194, 843314857
    %v197 = vmul.u32 %v195, 843314857
    %v198 = vshra.s32 %v196, 16
    %v199 = vshra.s32 %v197, 16
    %v200 = vand.u32 %v198, 65535
    %v201 = vand.u32 %v199, 65535
    %v202 = vxor.u32 %v196, %v200
    %v203 = vxor.u32 %v197, %v201
    %v204 = vand.u32 %v202, 8388607
    %v205 = vand.u32 %v203, 8388607
    %vm206 = vcmp.ge.s32.totalorder %v204, 4194304
    %vm207 = vcmp.ge.s32.totalorder %v205, 4194304
    %v208 = vmul.f32 %v162, 2.0
    %v209 = vmul.f32 %v163, 2.0
    %v210 = vsel %vm206, %v208, 0.0
    %v211 = vsel %vm207, %v209, 0.0
    %v212 = vpack.c.bf16 %v211, %v210
    %v213 = vld [vmem:[#allocation9] sm:$0xf]
    %v214 = vld [vmem:[#allocation9 + $0x4] sm:$0xf]
    %v215 = vld [vmem:[#allocation9 + $0x8] sm:$0xf]
    %v216 = vld [vmem:[#allocation9 + $0xc] sm:$0xf]
    %v217 = vld [vmem:[#allocation9 + $0x10] sm:$0xf]
    %v218 = vld [vmem:[#allocation9 + $0x14] sm:$0xf]
    %v219 = vld [vmem:[#allocation9 + $0x18] sm:$0xf]
    %v220 = vld [vmem:[#allocation9 + $0x1c] sm:$0xf]
    %v221 = vld [vmem:[#allocation9 + $0x20] sm:$0xf]
    %v222 = vld [vmem:[#allocation9 + $0x24] sm:$0xf]
    %v223 = vld [vmem:[#allocation9 + $0x28] sm:$0xf]
    %v224 = vld [vmem:[#allocation9 + $0x2c] sm:$0xf]
    %v225 = vld [vmem:[#allocation9 + $0x30] sm:$0xf]
    %v226 = vld [vmem:[#allocation9 + $0x34] sm:$0xf]
    %v227 = vld [vmem:[#allocation9 + $0x38] sm:$0xf]
    %v228 = vld [vmem:[#allocation9 + $0x3c] sm:$0xf]
    %v229 = vld [vmem:[%s5] sm:$0x1]
    %v231 = vperm.slane %v229, 0
    %v249 = vunpack.c.l.b16 %v213
    %v250 = vunpack.c.l.b16 %v214
    %v251 = vunpack.c.l.b16 %v215
    %v252 = vunpack.c.l.b16 %v216
    %v253 = vunpack.c.l.b16 %v217
    %v254 = vunpack.c.l.b16 %v218
    %v255 = vunpack.c.l.b16 %v219
    %v256 = vunpack.c.l.b16 %v220
    %v257 = vunpack.c.l.b16 %v221
    %v258 = vunpack.c.l.b16 %v222
    %v259 = vunpack.c.l.b16 %v223
    %v260 = vunpack.c.l.b16 %v224
    %v261 = vunpack.c.l.b16 %v225
    %v262 = vunpack.c.l.b16 %v226
    %v263 = vunpack.c.l.b16 %v227
    %v264 = vunpack.c.l.b16 %v228
    %v265 = vpack.c.b16 %v250, %v249
    %v266 = vpack.c.b16 %v252, %v251
    %v267 = vpack.c.b16 %v254, %v253
    %v268 = vpack.c.b16 %v256, %v255
    %v269 = vpack.c.b16 %v258, %v257
    %v270 = vpack.c.b16 %v260, %v259
    %v271 = vpack.c.b16 %v262, %v261
    %v272 = vpack.c.b16 %v264, %v263
    %281 = vmatpush.bf16.msra.mxu0 %v272
    %282 = vmatpush.bf16.msra.mxu0 %v271
    %283 = vmatpush.bf16.msra.mxu0 %v270
    %284 = vmatpush.bf16.msra.mxu0 %v269
    %285 = vmatpush.bf16.msra.mxu0 %v268
    %286 = vmatpush.bf16.msra.mxu0 %v267
    %287 = vmatpush.bf16.msra.mxu0 %v266
    %288 = vmatpush.bf16.msra.mxu0 %v265
    %289 = vmatmul.bf16.gmra.mxu0 %v212
    %v290 = vpop.f32.mrf.mxu0
    %v291 = vadd.f32 %v231, %v290
    %v292 = vpop.f32.mrf.mxu0
    %v293 = vadd.f32 %v231, %v292
    %294 = vdwg.mxu0
    %v295 = vmax.f32 %v291, 0.0
    %v296 = vmax.f32 %v293, 0.0
    %s297 = sadd.s32 %s70, 124076833
    %s298 = smul.u32 %s297, 1640531527
    %v299 = vstv %s298
    %v300 = vadd.s32 %v175, %v299
    %v301 = vadd.s32 %v176, %v299
    %v302 = vshra.s32 %v300, 16
    %v303 = vshra.s32 %v301, 16
    %v304 = vand.u32 %v302, 65535
    %v305 = vand.u32 %v303, 65535
    %v306 = vxor.u32 %v300, %v304
    %v307 = vxor.u32 %v301, %v305
    %v308 = vmul.u32 %v306, 2146121005
    %v309 = vmul.u32 %v307, 2146121005
    %v310 = vshra.s32 %v308, 15
    %v311 = vshra.s32 %v309, 15
    %v312 = vand.u32 %v310, 131071
    %v313 = vand.u32 %v311, 131071
    %v314 = vxor.u32 %v308, %v312
    %v315 = vxor.u32 %v309, %v313
    %v316 = vmul.u32 %v314, 843314857
    %v317 = vmul.u32 %v315, 843314857
    %v318 = vshra.s32 %v316, 16
    %v319 = vshra.s32 %v317, 16
    %v320 = vand.u32 %v318, 65535
    %v321 = vand.u32 %v319, 65535
    %v322 = vxor.u32 %v316, %v320
    %v323 = vxor.u32 %v317, %v321
    %v324 = vand.u32 %v322, 8388607
    %v325 = vand.u32 %v323, 8388607
    %vm326 = vcmp.ge.s32.totalorder %v324, 4194304
    %vm327 = vcmp.ge.s32.totalorder %v325, 4194304
    %v328 = vmul.f32 %v295, 2.0
    %v329 = vmul.f32 %v296, 2.0
    %v330 = vsel %vm326, %v328, 0.0
    %v331 = vsel %vm327, %v329, 0.0
    %332 = vst [vmem:[#allocation10] sm:$0xff] %v330
    %333 = vst [vmem:[#allocation10 + $0x8] sm:$0xff] %v331
    // Predicated region
    $region34: #{tpu_custom_call.1} parent=1 // pred_check
      _
    $region35: #{tpu_custom_call.1} parent=1 // pred_check_branch
      %335 = sbr.rel (0) target = $region37
    $region36: #{tpu_custom_call.1} parent=1 // pred_region
      %337 = vsyncadd [#allocation6], 0
      %s338 = sshll.u32 [#allocation10], 4
      %s339 = int_to_ptr.vmem [resolvable:$true] %s338
      %s340 = sshll.u32 %s6, 4
      %s341 = int_to_ptr.hbm [resolvable:$true] %s340
      %346 = dma.vmem_to_hbm [thread:$0]  %s339, 256, %s341, [#allocation6], 128, 128, 8
    $region37: #{tpu_custom_call.1} parent=1 // pred_fallthru
      _
    // Predicated region
    $region38: #{tpu_custom_call.1} parent=1 // pred_check
      _
    $region39: #{tpu_custom_call.1} parent=1 // pred_check_branch
      %348 = sbr.rel (0) target = $region41
    $region40: #{tpu_custom_call.1} parent=1 // pred_region
      %350 = dma.done [#allocation6], 256
    $region41: #{tpu_custom_call.1} parent=1 // pred_fallthru
      _
    %351 = vsyncpa [#allocation5], 1
    %352 = vsyncpa [#allocation8], 1
    %353 = vsyncpa [#allocation6], 1

</llo_original>
